<compile_context>
chip_gen: v7x
topology: tpu7x:2x2x1
jax: 0.10.0
libtpu: 0.0.40
codegen_flags: <defaults>
</compile_context>

<pallas_src>
import jax
import jax.numpy as jnp
from jax import lax
from jax.experimental import pallas as pl
from jax.experimental.pallas import tpu as pltpu


LN_EPS = 1e-5           # torch.nn.LayerNorm default
L2_EPS = 1e-12          # robustness for degenerate / masked rows
_SQRT_2_OVER_PI = 0.7978845608028654
_INV_SQRT_2 = 0.7071067811865476


def _gelu_tanh(x):
    # tanh approximation: routes the transcendental to the EUP slot instead of
    # a long f32 erf polynomial on the VALU (binding slot on v6e/v7x tiles).
    x3 = x * x * x
    return 0.5 * x * (1.0 + jnp.tanh(_SQRT_2_OVER_PI * (x + 0.044715 * x3)))


def _gelu_erf(x):
    # F.gelu default (exact, erf-based) to match the PyTorch module bit-for-bit.
    return 0.5 * x * (1.0 + lax.erf(x * jnp.float32(_INV_SQRT_2)))


def _make_projection_norm_kernel(gelu_fn):
    def kernel(x_ref, w1_ref, w2_ref, gb_ref, o_ref):
        """One batch tile: L2norm(LayerNorm(lin1(x) + lin2(gelu(lin1(x)))))."""
        # Features arrive in their native dtype (f32 from the backbone);
        # the bf16 cast happens on the VPU, hidden under the MXU.
        xb = x_ref[...].astype(jnp.bfloat16)        # (bm, d_in)
        w1 = w1_ref[...]                             # (d_in, d_out)  bf16
        w2 = w2_ref[...]                             # (d_out, d_out) bf16

        # linear1 (no bias): bf16 MXU inputs, f32 accumulation.
        embed1 = jnp.dot(xb, w1, preferred_element_type=jnp.float32)
        # linear2(gelu(embed1)) (no bias); dropout == identity (eval).
        h = gelu_fn(embed1)
        embed2 = jnp.dot(h.astype(w2.dtype), w2,
                         preferred_element_type=jnp.float32)

        s = embed1 + embed2                          # (bm, d_out) f32

        # LayerNorm over the feature dim (biased variance, as in torch), f32.
        gb = gb_ref[...].astype(jnp.float32)         # (2, d_out): gamma, beta
        gamma = gb[0:1, :]
        beta = gb[1:2, :]
        mean = jnp.mean(s, axis=-1, keepdims=True)
        cent = s - mean
        var = jnp.mean(cent * cent, axis=-1, keepdims=True)
        y = cent * lax.rsqrt(var + LN_EPS) * gamma + beta

        # L2 normalization via rsqrt (EUP) + eps so masked rows never hit inf.
        inv_norm = lax.rsqrt(jnp.sum(y * y, axis=-1, keepdims=True) + L2_EPS)
        o_ref[...] = (y * inv_norm).astype(o_ref.dtype)

    return kernel


def _round_up(x, m):
    return (x + m - 1) // m * m


def _num_tensorcores():
    """2 on v7x (grid 'parallel' axes shard across its 2 TCs), else 1."""
    try:
        kind = jax.devices()[0].device_kind.lower()
    except Exception:
        return 1
    return 2 if "7" in kind else 1


def _vmem_capacity_bytes():
    try:
        return int(pltpu.get_tpu_info().vmem_capacity_bytes)
    except Exception:
        return 64 * 1024 * 1024  # conservative (v7x) fallback


def _pick_bm(batch, num_tc):
    """MXU-friendly batch tile (multiple of 16, capped at 256)."""
    cap = 256
    if num_tc <= 1:
        # Single TensorCore: the grid is a serial loop; biggest tile wins
        # (fewest ~0.35us per-step overheads, full MXU M dimension).
        return min(cap, _round_up(batch, 16))
    # v7x: prefer an even number of grid steps (>=2) so both TCs get equal
    # work; fall back to >=2 steps, then to a single big tile.
    for cand in (cap, 128, 64, 32, 16):
        steps = pl.cdiv(batch, cand)
        if steps >= 2 and steps % 2 == 0:
            return cand
    for cand in (cap, 128, 64, 32, 16):
        if pl.cdiv(batch, cand) >= 2:
            return cand
    return min(cap, _round_up(batch, 16))


def prepare_vision_head_params(w1_t, w2_t, gamma, beta):
    """One-time staging of the frozen projection-head parameters.

    w1_t: [d_in, d_out] (= torch linear1.weight.T), w2_t: [d_out, d_out]
    (= torch linear2.weight.T), gamma/beta: [d_out] LayerNorm weight/bias.
    Do this once at load time — the head is frozen — so the bf16 casts and the
    gamma/beta stack don't re-run (and re-write HBM) on every forward.
    """
    w1_b = jnp.asarray(w1_t, dtype=jnp.bfloat16)
    w2_b = jnp.asarray(w2_t, dtype=jnp.bfloat16)
    gb = jnp.stack([jnp.asarray(gamma), jnp.asarray(beta)]).astype(jnp.float32)
    return w1_b, w2_b, gb


def vision_encoder_head(feats, params, *, bm=None, out_dtype=jnp.float32,
                        gelu_approx=True):
    """feats: [B, d_in] backbone features (f32 or bf16).
    params: output of prepare_vision_head_params().
    Returns [B, d_out] L2-normalized projections (rows are unit-norm).
    """
    w1_b, w2_b, gb = params
    B, d_in = feats.shape
    d_out = w1_b.shape[1]
    assert w1_b.shape == (d_in, d_out)
    assert w2_b.shape == (d_out, d_out)
    assert gb.shape == (2, d_out)
    # LayerNorm is over d_out, so padding d_out would change the statistics;
    # require a lane-dense multiple of 128 instead (real CLIP heads are >=128).
    # TODO(synk): support d_out % 128 != 0 via an in-kernel masked LayerNorm.
    assert d_out % 128 == 0, "d_out must be a multiple of 128 (lane width)"

    num_tc = _num_tensorcores()
    if bm is None:
        bm = _pick_bm(B, num_tc)
    bm = max(16, _round_up(bm, 16))

    # No jnp.pad: Pallas masks the ragged last batch tile; the per-row math is
    # independent, so garbage rows in the padded block are inert + discarded.
    grid = (pl.cdiv(B, bm),)

    feat_bytes = jnp.dtype(feats.dtype).itemsize
    out_bytes = jnp.dtype(out_dtype).itemsize

    # VMEM budget: double-buffered feature/output tiles + resident weights,
    # with headroom; clamp to 3/4 of this generation's physical VMEM.
    est = (2 * bm * d_in * feat_bytes                 # feature tiles x2
           + 2 * bm * d_out * out_bytes               # output tiles x2
           + (d_in * d_out + d_out * d_out) * 2       # resident bf16 weights
           + 2 * d_out * 4)                           # gamma/beta
    vmem_limit = int(min(max(3 * est, 16 * 1024 * 1024),
                         (3 * _vmem_capacity_bytes()) // 4))

    cost = pl.CostEstimate(
        flops=2 * B * (d_in * d_out + d_out * d_out),
        transcendentals=B * d_out,                    # gelu + rsqrt
        bytes_accessed=(B * d_in * feat_bytes + B * d_out * out_bytes
                        + (d_in * d_out + d_out * d_out) * 2 + 2 * d_out * 4),
    )

    kernel = _make_projection_norm_kernel(_gelu_tanh if gelu_approx
                                          else _gelu_erf)

    out = pl.pallas_call(
        kernel,
        out_shape=jax.ShapeDtypeStruct((B, d_out), out_dtype),
        grid_spec=pltpu.PrefetchScalarGridSpec(
            num_scalar_prefetch=0,
            grid=grid,
            in_specs=[
                pl.BlockSpec((bm, d_in), lambda i: (i, 0)),        # feature tile
                pl.BlockSpec((d_in, d_out), lambda i: (0, 0),      # W1^T resident
                             pipeline_mode=pl.Buffered(1)),
                pl.BlockSpec((d_out, d_out), lambda i: (0, 0),     # W2^T resident
                             pipeline_mode=pl.Buffered(1)),
                pl.BlockSpec((2, d_out), lambda i: (0, 0),         # LN gamma/beta
                             pipeline_mode=pl.Buffered(1)),
            ],
            out_specs=pl.BlockSpec((bm, d_out), lambda i: (i, 0)),
        ),
        compiler_params=pltpu.CompilerParams(
            dimension_semantics=("parallel",),
            vmem_limit_bytes=vmem_limit,
        ),
        cost_estimate=cost,
    )(feats, w1_b, w2_b, gb)

    return out


def reference_head(feats, w1_t, w2_t, gamma, beta, *,
                   matmul_dtype=jnp.float32, gelu_approx=True):
    """Pure-JAX reference of the same forward."""
    gelu_fn = _gelu_tanh if gelu_approx else _gelu_erf
    x = feats.astype(matmul_dtype)
    w1 = w1_t.astype(matmul_dtype)
    w2 = w2_t.astype(matmul_dtype)
    embed1 = jnp.dot(x, w1, preferred_element_type=jnp.float32)
    embed2 = jnp.dot(gelu_fn(embed1).astype(matmul_dtype), w2,
                     preferred_element_type=jnp.float32)
    s = embed1 + embed2
    mean = jnp.mean(s, axis=-1, keepdims=True)
    var = jnp.mean((s - mean) ** 2, axis=-1, keepdims=True)
    y = (s - mean) * lax.rsqrt(var + LN_EPS) * gamma + beta
    return y / jnp.linalg.norm(y, axis=-1, keepdims=True)


if __name__ == "__main__":
    # Small shapes consistent with the module's forward:
    #   backbone features [B, d_in] -> projected, L2-normalized [B, d_out].
    # d_out kept lane-dense (multiple of 128).
    B, d_in, d_out = 16, 256, 128

    key = jax.random.PRNGKey(0)
    k_x, k_w1, k_w2 = jax.random.split(key, 3)

    feats = jax.random.normal(k_x, (B, d_in), dtype=jnp.float32)

    # torch nn.Linear stores W as (out, in); pre-transposed here to (in, out).
    w1_t = jax.random.normal(k_w1, (d_in, d_out), dtype=jnp.float32) / jnp.sqrt(
        jnp.float32(d_in))
    w2_t = jax.random.normal(k_w2, (d_out, d_out), dtype=jnp.float32) / jnp.sqrt(
        jnp.float32(d_out))
    gamma = jnp.ones((d_out,), dtype=jnp.float32)   # LayerNorm weight
    beta = jnp.zeros((d_out,), dtype=jnp.float32)   # LayerNorm bias

    # One-time staging of the frozen head params (bf16 weights, stacked LN).
    params = prepare_vision_head_params(w1_t, w2_t, gamma, beta)

    out = vision_encoder_head(feats, params)
    out = jax.block_until_ready(out)

    assert out.shape == (B, d_out)
    assert bool(jnp.all(jnp.isfinite(out)))
    # Output rows must be unit-norm.
    assert jnp.allclose(jnp.linalg.norm(out, axis=-1), 1.0, atol=1e-3)

    # Matches a reference using the same bf16 matmul inputs / tanh GELU.
    ref_same = reference_head(feats, w1_t, w2_t, gamma, beta,
                              matmul_dtype=jnp.bfloat16, gelu_approx=True)
    assert jnp.allclose(out, ref_same, atol=2e-3, rtol=2e-3), "mismatch vs bf16 ref"

    # Stays close to the all-f32 exact-erf reference (bf16/tanh tolerance).
    ref_f32 = reference_head(feats, w1_t, w2_t, gamma, beta,
                             matmul_dtype=jnp.float32, gelu_approx=False)
    assert jnp.allclose(out, ref_f32, atol=5e-2, rtol=5e-2), "mismatch vs f32 ref"

    print("KERNEL_OK")
</pallas_src>

<mosaic_0001>
module attributes {stable_mosaic.version = 11 : i64} {
  func.func @kernel(%arg0: i32, %arg1: memref<16x256xf32, #tpu.memory_space<vmem>>, %arg2: memref<256x128xbf16, #tpu.memory_space<vmem>>, %arg3: memref<128x128xbf16, #tpu.memory_space<vmem>>, %arg4: memref<2x128xf32, #tpu.memory_space<vmem>>, %arg5: memref<16x128xf32, #tpu.memory_space<vmem>>) attributes {dimension_semantics = [#tpu.dimension_semantics<parallel>], iteration_bounds = array<i64: 1>, scalar_prefetch = 0 : i64, scratch_operands = 0 : i64, tpu.core_type = #tpu.core_type<tc>, window_params = [{transform_indices = @transform_0, window_bounds = array<i64: 16, 256>}, {pipeline_mode = #tpu.pipeline_mode<synchronous>, transform_indices = @transform_1, window_bounds = array<i64: 256, 128>}, {pipeline_mode = #tpu.pipeline_mode<synchronous>, transform_indices = @transform_2, window_bounds = array<i64: 128, 128>}, {pipeline_mode = #tpu.pipeline_mode<synchronous>, transform_indices = @transform_3, window_bounds = array<i64: 2, 128>}, {transform_indices = @transform_4, window_bounds = array<i64: 16, 128>}]} {
    %c0 = arith.constant 0 : index
    %c0_0 = arith.constant 0 : index
    %0 = vector.load %arg1[%c0, %c0_0] : memref<16x256xf32, #tpu.memory_space<vmem>>, vector<16x256xf32>
    %1 = arith.truncf %0 : vector<16x256xf32> to vector<16x256xbf16>
    %c0_1 = arith.constant 0 : index
    %c0_2 = arith.constant 0 : index
    %2 = vector.load %arg2[%c0_1, %c0_2] : memref<256x128xbf16, #tpu.memory_space<vmem>>, vector<256x128xbf16>
    %c0_3 = arith.constant 0 : index
    %c0_4 = arith.constant 0 : index
    %3 = vector.load %arg3[%c0_3, %c0_4] : memref<128x128xbf16, #tpu.memory_space<vmem>>, vector<128x128xbf16>
    %cst = arith.constant dense<0.000000e+00> : vector<16x128xf32>
    %4 = tpu.matmul %1, %2, %cst {dimension_numbers = #tpu.dot_dimension_numbers<[1], [0], [0], [1], [0, 0, 1, 1], [], []>} : vector<16x256xbf16>, vector<256x128xbf16>, vector<16x128xf32> -> vector<16x128xf32>
    %5 = arith.mulf %4, %4 : vector<16x128xf32>
    %6 = arith.mulf %5, %4 : vector<16x128xf32>
    %cst_5 = arith.constant 5.000000e-01 : f32
    %7 = vector.broadcast %cst_5 : f32 to vector<16x128xf32>
    %8 = arith.mulf %7, %4 : vector<16x128xf32>
    %cst_6 = arith.constant 4.471500e-02 : f32
    %9 = vector.broadcast %cst_6 : f32 to vector<16x128xf32>
    %10 = arith.mulf %9, %6 : vector<16x128xf32>
    %11 = arith.addf %4, %10 : vector<16x128xf32>
    %cst_7 = arith.constant 0.797884583 : f32
    %12 = vector.broadcast %cst_7 : f32 to vector<16x128xf32>
    %13 = arith.mulf %12, %11 : vector<16x128xf32>
    %14 = math.tanh %13 : vector<16x128xf32>
    %cst_8 = arith.constant 1.000000e+00 : f32
    %15 = vector.broadcast %cst_8 : f32 to vector<16x128xf32>
    %16 = arith.addf %15, %14 : vector<16x128xf32>
    %17 = arith.mulf %8, %16 : vector<16x128xf32>
    %18 = arith.truncf %17 : vector<16x128xf32> to vector<16x128xbf16>
    %cst_9 = arith.constant dense<0.000000e+00> : vector<16x128xf32>
    %19 = tpu.matmul %18, %3, %cst_9 {dimension_numbers = #tpu.dot_dimension_numbers<[1], [0], [0], [1], [0, 0, 1, 1], [], []>} : vector<16x128xbf16>, vector<128x128xbf16>, vector<16x128xf32> -> vector<16x128xf32>
    %20 = arith.addf %4, %19 : vector<16x128xf32>
    %c0_10 = arith.constant 0 : index
    %c0_11 = arith.constant 0 : index
    %21 = vector.load %arg4[%c0_10, %c0_11] : memref<2x128xf32, #tpu.memory_space<vmem>>, vector<2x128xf32>
    %22 = vector.extract_strided_slice %21 {offsets = [0, 0], sizes = [1, 128], strides = [1, 1]} : vector<2x128xf32> to vector<1x128xf32>
    %23 = vector.extract_strided_slice %21 {offsets = [1, 0], sizes = [1, 128], strides = [1, 1]} : vector<2x128xf32> to vector<1x128xf32>
    %cst_12 = arith.constant dense<0.000000e+00> : vector<16xf32>
    %24 = vector.multi_reduction <add>, %20, %cst_12 [1] : vector<16x128xf32> to vector<16xf32>
    %25 = vector.shape_cast %24 : vector<16xf32> to vector<16x1xf32>
    %cst_13 = arith.constant 1.280000e+02 : f32
    %26 = vector.broadcast %cst_13 : f32 to vector<16x1xf32>
    %27 = arith.divf %25, %26 : vector<16x1xf32>
    %28 = vector.broadcast %27 : vector<16x1xf32> to vector<16x128xf32>
    %29 = arith.subf %20, %28 : vector<16x128xf32>
    %30 = arith.mulf %29, %29 : vector<16x128xf32>
    %cst_14 = arith.constant dense<0.000000e+00> : vector<16xf32>
    %31 = vector.multi_reduction <add>, %30, %cst_14 [1] : vector<16x128xf32> to vector<16xf32>
    %32 = vector.shape_cast %31 : vector<16xf32> to vector<16x1xf32>
    %cst_15 = arith.constant 1.280000e+02 : f32
    %33 = vector.broadcast %cst_15 : f32 to vector<16x1xf32>
    %34 = arith.divf %32, %33 : vector<16x1xf32>
    %cst_16 = arith.constant 9.99999974E-6 : f32
    %35 = vector.broadcast %cst_16 : f32 to vector<16x1xf32>
    %36 = arith.addf %34, %35 : vector<16x1xf32>
    %37 = math.rsqrt %36 : vector<16x1xf32>
    %38 = vector.broadcast %37 : vector<16x1xf32> to vector<16x128xf32>
    %39 = arith.mulf %29, %38 : vector<16x128xf32>
    %40 = vector.broadcast %22 : vector<1x128xf32> to vector<16x128xf32>
    %41 = arith.mulf %39, %40 : vector<16x128xf32>
    %42 = vector.broadcast %23 : vector<1x128xf32> to vector<16x128xf32>
    %43 = arith.addf %41, %42 : vector<16x128xf32>
    %44 = arith.mulf %43, %43 : vector<16x128xf32>
    %cst_17 = arith.constant dense<0.000000e+00> : vector<16xf32>
    %45 = vector.multi_reduction <add>, %44, %cst_17 [1] : vector<16x128xf32> to vector<16xf32>
    %46 = vector.shape_cast %45 : vector<16xf32> to vector<16x1xf32>
    %cst_18 = arith.constant 9.99999996E-13 : f32
    %47 = vector.broadcast %cst_18 : f32 to vector<16x1xf32>
    %48 = arith.addf %46, %47 : vector<16x1xf32>
    %49 = math.rsqrt %48 : vector<16x1xf32>
    %50 = vector.broadcast %49 : vector<16x1xf32> to vector<16x128xf32>
    %51 = arith.mulf %43, %50 : vector<16x128xf32>
    %c0_19 = arith.constant 0 : index
    %c0_20 = arith.constant 0 : index
    %52 = vector.load %arg5[%c0_19, %c0_20] : memref<16x128xf32, #tpu.memory_space<vmem>>, vector<16x128xf32>
    tpu.vector_store %arg5[%c0_19, %c0_20], %51 {strides = array<i32>} : memref<16x128xf32, #tpu.memory_space<vmem>>, vector<16x128xf32>,
    return
  }
  func.func @transform_0(%arg0: i32) -> (i32, i32) {
    %c0_i32 = arith.constant 0 : i32
    %c0_i32_0 = arith.constant 0 : i32
    return %arg0, %c0_i32 : i32, i32
  }
  func.func @transform_1(%arg0: i32) -> (i32, i32) {
    %c0_i32 = arith.constant 0 : i32
    %c0_i32_0 = arith.constant 0 : i32
    %c0_i32_1 = arith.constant 0 : i32
    return %c0_i32, %c0_i32_0 : i32, i32
  }
  func.func @transform_2(%arg0: i32) -> (i32, i32) {
    %c0_i32 = arith.constant 0 : i32
    %c0_i32_0 = arith.constant 0 : i32
    %c0_i32_1 = arith.constant 0 : i32
    return %c0_i32, %c0_i32_0 : i32, i32
  }
  func.func @transform_3(%arg0: i32) -> (i32, i32) {
    %c0_i32 = arith.constant 0 : i32
    %c0_i32_0 = arith.constant 0 : i32
    %c0_i32_1 = arith.constant 0 : i32
    return %c0_i32, %c0_i32_0 : i32, i32
  }
  func.func @transform_4(%arg0: i32) -> (i32, i32) {
    %c0_i32 = arith.constant 0 : i32
    %c0_i32_0 = arith.constant 0 : i32
    return %arg0, %c0_i32 : i32, i32
  }
}

</mosaic_0001>

<llo_original>
// kernel: tpu_custom_call.1
$region0: #{tpu_custom_call.1}
  #allocation0 [shape = 'u32[]', space=smem, size = 0x4, offset = 0x4, fixed_abs, tag = 'smem constant byte address 0x4 - core index']
  #allocation1 [shape = 'u32[144,128]{1,0:T(1,128)}', space=vmem, size = 0x12000, scoped, tag = 'internal scratch']
  %s0 = inlined_call_operand.hbm [shape: f32[16,256], index: 0, kind: input, shape index: {}]
  %s1 = inlined_call_operand.hbm [shape: bf16[256,128], index: 1, kind: input, shape index: {}]
  %s2 = inlined_call_operand.hbm [shape: bf16[128,128], index: 2, kind: input, shape index: {}]
  %s3 = inlined_call_operand.vmem [shape: f32[2,128], index: 3, kind: input, shape index: {}]
  %s4 = inlined_call_operand.hbm [shape: f32[16,128], index: 4, kind: output, shape index: {}]
  %s5 = sld [smem:[#allocation0]]
  $region38: #{tpu_custom_call.1} parent=0
    _
  %s7 = ssub.s32 1, %s5
  %s8 = scalar_select 0, %s7, %s5
  $region1: #{tpu_custom_call.1} parent=0
    #allocation2 [shape = 'u8[16384]{0}', space=vmem, size = 0x4000, scoped, tag = 'input window, operand 0, single buffered']
    #allocation3 [shape = 's32[1]{0}', space=sflag, size = 0x4, scoped, tag = 'scoped memory for tpu_custom_call.1']
    #allocation4 [shape = 's32[1]{0}', space=sflag, size = 0x4, scoped, tag = 'scoped memory for tpu_custom_call.1']
    #allocation5 [shape = 'u8[65536]{0}', space=vmem, size = 0x10000, scoped, tag = 'input window, operand 1, single buffered']
    #allocation6 [shape = 's32[1]{0}', space=sflag, size = 0x4, scoped, tag = 'scoped memory for tpu_custom_call.1']
    #allocation7 [shape = 'u8[32768]{0}', space=vmem, size = 0x8000, scoped, tag = 'input window, operand 2, single buffered']
    #allocation8 [shape = 'u8[8192]{0}', space=vmem, size = 0x2000, scoped, tag = 'output window, operand 0, single buffered']
    %9 = vsyncpa [#allocation3], 0
    %10 = vsyncpa [#allocation6], 0
    %11 = vsyncpa [#allocation4], 0
    // Predicated region
    $region2: #{tpu_custom_call.1} parent=1 // pred_check
      _
    $region3: #{tpu_custom_call.1} parent=1 // pred_check_branch
      %13 = sbr.rel (0) target = $region5
    $region4: #{tpu_custom_call.1} parent=1 // pred_region
      %s15 = ssub.s32 512, 512
      %16 = vsyncadd [#allocation3], %s15
      %s17 = sshll.u32 [#allocation2], 4
      %s18 = int_to_ptr.vmem [resolvable:$true] %s17
      %23 = dma.hbm_to_vmem [thread:$0]  %s0, 512, %s18, [#allocation3], 256, 256, 16
    $region5: #{tpu_custom_call.1} parent=1 // pred_fallthru
      _
    // Predicated region
    $region6: #{tpu_custom_call.1} parent=1 // pred_check
      _
    $region7: #{tpu_custom_call.1} parent=1 // pred_check_branch
      %25 = sbr.rel (0) target = $region9
    $region8: #{tpu_custom_call.1} parent=1 // pred_region
      %s27 = ssub.s32 2048, 2048
      %28 = vsyncadd [#allocation6], %s27
      %s29 = sshll.u32 [#allocation5], 4
      %s30 = int_to_ptr.vmem [resolvable:$true] %s29
      %35 = dma.hbm_to_vmem [thread:$0]  %s1, 2048, %s30, [#allocation6], 64, 64, 4
    $region9: #{tpu_custom_call.1} parent=1 // pred_fallthru
      _
    // Predicated region
    $region10: #{tpu_custom_call.1} parent=1 // pred_check
      _
    $region11: #{tpu_custom_call.1} parent=1 // pred_check_branch
      %37 = sbr.rel (0) target = $region13
    $region12: #{tpu_custom_call.1} parent=1 // pred_region
      %s39 = ssub.s32 1024, 1024
      %40 = vsyncadd [#allocation6], %s39
      %s41 = sshll.u32 [#allocation7], 4
      %s42 = int_to_ptr.vmem [resolvable:$true] %s41
      %47 = dma.hbm_to_vmem [thread:$0]  %s2, 1024, %s42, [#allocation6], 64, 64, 4
    $region13: #{tpu_custom_call.1} parent=1 // pred_fallthru
      _
    // Predicated region
    $region14: #{tpu_custom_call.1} parent=1 // pred_check
      _
    $region15: #{tpu_custom_call.1} parent=1 // pred_check_branch
      %49 = sbr.rel (0) target = $region17
    $region16: #{tpu_custom_call.1} parent=1 // pred_region
      _
    $region17: #{tpu_custom_call.1} parent=1 // pred_fallthru
      _
    // Predicated region
    $region18: #{tpu_custom_call.1} parent=1 // pred_check
      _
    $region19: #{tpu_custom_call.1} parent=1 // pred_check_branch
      %51 = sbr.rel (0) target = $region21
    $region20: #{tpu_custom_call.1} parent=1 // pred_region
      %52 = dma.done [#allocation3], 512
    $region21: #{tpu_custom_call.1} parent=1 // pred_fallthru
      _
    // Predicated region
    $region22: #{tpu_custom_call.1} parent=1 // pred_check
      _
    $region23: #{tpu_custom_call.1} parent=1 // pred_check_branch
      %54 = sbr.rel (0) target = $region25
    $region24: #{tpu_custom_call.1} parent=1 // pred_region
      %55 = dma.done [#allocation6], 2048
    $region25: #{tpu_custom_call.1} parent=1 // pred_fallthru
      _
    // Predicated region
    $region26: #{tpu_custom_call.1} parent=1 // pred_check
      _
    $region27: #{tpu_custom_call.1} parent=1 // pred_check_branch
      %57 = sbr.rel (0) target = $region29
    $region28: #{tpu_custom_call.1} parent=1 // pred_region
      %58 = dma.done [#allocation6], 1024
    $region29: #{tpu_custom_call.1} parent=1 // pred_fallthru
      _
    %v60 = vld [vmem:[#allocation2] sm:$0xff]
    %v61 = vld [vmem:[#allocation2 + $0x8] sm:$0xff]
    %v62 = vld [vmem:[#allocation2 + $0x10] sm:$0xff]
    %v63 = vld [vmem:[#allocation2 + $0x18] sm:$0xff]
    %v64 = vpack.c.bf16 %v62, %v60
    %v65 = vpack.c.bf16 %v63, %v61
    %v66 = vld [vmem:[#allocation5] sm:$0xf]
    %v67 = vld [vmem:[#allocation5 + $0x4] sm:$0xf]
    %v68 = vld [vmem:[#allocation5 + $0x8] sm:$0xf]
    %v69 = vld [vmem:[#allocation5 + $0xc] sm:$0xf]
    %v70 = vld [vmem:[#allocation5 + $0x10] sm:$0xf]
    %v71 = vld [vmem:[#allocation5 + $0x14] sm:$0xf]
    %v72 = vld [vmem:[#allocation5 + $0x18] sm:$0xf]
    %v73 = vld [vmem:[#allocation5 + $0x1c] sm:$0xf]
    %v74 = vld [vmem:[#allocation5 + $0x20] sm:$0xf]
    %v75 = vld [vmem:[#allocation5 + $0x24] sm:$0xf]
    %v76 = vld [vmem:[#allocation5 + $0x28] sm:$0xf]
    %v77 = vld [vmem:[#allocation5 + $0x2c] sm:$0xf]
    %v78 = vld [vmem:[#allocation5 + $0x30] sm:$0xf]
    %v79 = vld [vmem:[#allocation5 + $0x34] sm:$0xf]
    %v80 = vld [vmem:[#allocation5 + $0x38] sm:$0xf]
    %v81 = vld [vmem:[#allocation5 + $0x3c] sm:$0xf]
    %v82 = vld [vmem:[#allocation5 + $0x40] sm:$0xf]
    %v83 = vld [vmem:[#allocation5 + $0x44] sm:$0xf]
    %v84 = vld [vmem:[#allocation5 + $0x48] sm:$0xf]
    %v85 = vld [vmem:[#allocation5 + $0x4c] sm:$0xf]
    %v86 = vld [vmem:[#allocation5 + $0x50] sm:$0xf]
    %v87 = vld [vmem:[#allocation5 + $0x54] sm:$0xf]
    %v88 = vld [vmem:[#allocation5 + $0x58] sm:$0xf]
    %v89 = vld [vmem:[#allocation5 + $0x5c] sm:$0xf]
    %v90 = vld [vmem:[#allocation5 + $0x60] sm:$0xf]
    %v91 = vld [vmem:[#allocation5 + $0x64] sm:$0xf]
    %v92 = vld [vmem:[#allocation5 + $0x68] sm:$0xf]
    %v93 = vld [vmem:[#allocation5 + $0x6c] sm:$0xf]
    %v94 = vld [vmem:[#allocation5 + $0x70] sm:$0xf]
    %v95 = vld [vmem:[#allocation5 + $0x74] sm:$0xf]
    %v96 = vld [vmem:[#allocation5 + $0x78] sm:$0xf]
    %v97 = vld [vmem:[#allocation5 + $0x7c] sm:$0xf]
    %v98 = vld [vmem:[#allocation7] sm:$0xf]
    %v99 = vld [vmem:[#allocation7 + $0x4] sm:$0xf]
    %v100 = vld [vmem:[#allocation7 + $0x8] sm:$0xf]
    %v101 = vld [vmem:[#allocation7 + $0xc] sm:$0xf]
    %v102 = vld [vmem:[#allocation7 + $0x10] sm:$0xf]
    %v103 = vld [vmem:[#allocation7 + $0x14] sm:$0xf]
    %v104 = vld [vmem:[#allocation7 + $0x18] sm:$0xf]
    %v105 = vld [vmem:[#allocation7 + $0x1c] sm:$0xf]
    %v106 = vld [vmem:[#allocation7 + $0x20] sm:$0xf]
    %v107 = vld [vmem:[#allocation7 + $0x24] sm:$0xf]
    %v108 = vld [vmem:[#allocation7 + $0x28] sm:$0xf]
    %v109 = vld [vmem:[#allocation7 + $0x2c] sm:$0xf]
    %v110 = vld [vmem:[#allocation7 + $0x30] sm:$0xf]
    %v111 = vld [vmem:[#allocation7 + $0x34] sm:$0xf]
    %v112 = vld [vmem:[#allocation7 + $0x38] sm:$0xf]
    %v113 = vld [vmem:[#allocation7 + $0x3c] sm:$0xf]
    %v146 = vunpack.c.l.b16 %v66
    %v147 = vunpack.c.l.b16 %v67
    %v148 = vunpack.c.l.b16 %v68
    %v149 = vunpack.c.l.b16 %v69
    %v150 = vunpack.c.l.b16 %v70
    %v151 = vunpack.c.l.b16 %v71
    %v152 = vunpack.c.l.b16 %v72
    %v153 = vunpack.c.l.b16 %v73
    %v154 = vunpack.c.l.b16 %v74
    %v155 = vunpack.c.l.b16 %v75
    %v156 = vunpack.c.l.b16 %v76
    %v157 = vunpack.c.l.b16 %v77
    %v158 = vunpack.c.l.b16 %v78
    %v159 = vunpack.c.l.b16 %v79
    %v160 = vunpack.c.l.b16 %v80
    %v161 = vunpack.c.l.b16 %v81
    %v162 = vunpack.c.l.b16 %v82
    %v163 = vunpack.c.l.b16 %v83
    %v164 = vunpack.c.l.b16 %v84
    %v165 = vunpack.c.l.b16 %v85
    %v166 = vunpack.c.l.b16 %v86
    %v167 = vunpack.c.l.b16 %v87
    %v168 = vunpack.c.l.b16 %v88
    %v169 = vunpack.c.l.b16 %v89
    %v170 = vunpack.c.l.b16 %v90
    %v171 = vunpack.c.l.b16 %v91
    %v172 = vunpack.c.l.b16 %v92
    %v173 = vunpack.c.l.b16 %v93
    %v174 = vunpack.c.l.b16 %v94
    %v175 = vunpack.c.l.b16 %v95
    %v176 = vunpack.c.l.b16 %v96
    %v177 = vunpack.c.l.b16 %v97
    %v178 = vpack.c.b16 %v147, %v146
    %v179 = vpack.c.b16 %v149, %v148
    %v180 = vpack.c.b16 %v151, %v150
    %v181 = vpack.c.b16 %v153, %v152
    %v182 = vpack.c.b16 %v155, %v154
    %v183 = vpack.c.b16 %v157, %v156
    %v184 = vpack.c.b16 %v159, %v158
    %v185 = vpack.c.b16 %v161, %v160
    %v186 = vpack.c.b16 %v163, %v162
    %v187 = vpack.c.b16 %v165, %v164
    %v188 = vpack.c.b16 %v167, %v166
    %v189 = vpack.c.b16 %v169, %v168
    %v190 = vpack.c.b16 %v171, %v170
    %v191 = vpack.c.b16 %v173, %v172
    %v192 = vpack.c.b16 %v175, %v174
    %v193 = vpack.c.b16 %v177, %v176
    %210 = vmatprep.subr.bf16.mxu0 0
    %211 = vmatpush1.bf16.msra.mxu0 %v178
    %212 = vmatprep.subr.bf16.mxu0 0
    %213 = vmatpush1.bf16.msra.mxu0 %v179
    %214 = vmatprep.subr.bf16.mxu0 0
    %215 = vmatpush1.bf16.msra.mxu0 %v180
    %216 = vmatprep.subr.bf16.mxu0 0
    %217 = vmatpush1.bf16.msra.mxu0 %v181
    %218 = vmatprep.subr.bf16.mxu0 0
    %219 = vmatpush1.bf16.msra.mxu0 %v182
    %220 = vmatprep.subr.bf16.mxu0 0
    %221 = vmatpush1.bf16.msra.mxu0 %v183
    %222 = vmatprep.subr.bf16.mxu0 0
    %223 = vmatpush1.bf16.msra.mxu0 %v184
    %224 = vmatprep.subr.bf16.mxu0 0
    %225 = vmatpush1.bf16.msra.mxu0 %v185
    %226 = vmatprep.subr.bf16.mxu0 0
    %227 = vmatpush1.bf16.msra.mxu0 %v186
    %228 = vmatprep.subr.bf16.mxu0 0
    %229 = vmatpush1.bf16.msra.mxu0 %v187
    %230 = vmatprep.subr.bf16.mxu0 0
    %231 = vmatpush1.bf16.msra.mxu0 %v188
    %232 = vmatprep.subr.bf16.mxu0 0
    %233 = vmatpush1.bf16.msra.mxu0 %v189
    %234 = vmatprep.subr.bf16.mxu0 0
    %235 = vmatpush1.bf16.msra.mxu0 %v190
    %236 = vmatprep.subr.bf16.mxu0 0
    %237 = vmatpush1.bf16.msra.mxu0 %v191
    %238 = vmatprep.subr.bf16.mxu0 0
    %239 = vmatpush1.bf16.msra.mxu0 %v192
    %240 = vmatprep.subr.bf16.mxu0 0
    %241 = vmatpush1.bf16.msra.mxu0 %v193
    %242 = vmatprep.mubr.bf16.mxu0 %v65
    %243 = vmatmul.mubr.bf16.gmra.mrb[0].mxu0 %v64
    %v244 = vpop.f32.mrb[0].mxu0
    %v245 = vadd.f32 0.0, %v244
    %v246 = vpop.f32.mrb[0].mxu0
    %v247 = vpop.f32.mrb[0].mxu0
    %v248 = vadd.f32 0.0, %v247
    %v249 = vpop.f32.mrb[0].mxu0
    %250 = vdwg.mxu0
    %v251 = vmul.f32 %v245, %v245
    %v252 = vmul.f32 %v248, %v248
    %v253 = vmul.f32 %v251, %v245
    %v254 = vmul.f32 %v252, %v248
    %v255 = vmul.f32 %v245, 0.5
    %v256 = vmul.f32 %v248, 0.5
    %v257 = vmul.f32 %v253, 0.044715
    %v258 = vmul.f32 %v254, 0.044715
    %v259 = vadd.f32 %v245, %v257
    %v260 = vadd.f32 %v248, %v258
    %v261 = vmul.f32 %v259, 0.7978846
    %v262 = vmul.f32 %v260, 0.7978846
    %v263 = vtanh.pop %v261
    %v264 = vtanh.pop %v262
    %v265 = vadd.f32 %v263, 1.0
    %v266 = vadd.f32 %v264, 1.0
    %v267 = vmul.f32 %v255, %v265
    %v268 = vmul.f32 %v256, %v266
    %v269 = vpack.c.bf16 %v268, %v267
    %v286 = vunpack.c.l.b16 %v98
    %v287 = vunpack.c.l.b16 %v99
    %v288 = vunpack.c.l.b16 %v100
    %v289 = vunpack.c.l.b16 %v101
    %v290 = vunpack.c.l.b16 %v102
    %v291 = vunpack.c.l.b16 %v103
    %v292 = vunpack.c.l.b16 %v104
    %v293 = vunpack.c.l.b16 %v105
    %v294 = vunpack.c.l.b16 %v106
    %v295 = vunpack.c.l.b16 %v107
    %v296 = vunpack.c.l.b16 %v108
    %v297 = vunpack.c.l.b16 %v109
    %v298 = vunpack.c.l.b16 %v110
    %v299 = vunpack.c.l.b16 %v111
    %v300 = vunpack.c.l.b16 %v112
    %v301 = vunpack.c.l.b16 %v113
    %v302 = vpack.c.b16 %v287, %v286
    %v303 = vpack.c.b16 %v289, %v288
    %v304 = vpack.c.b16 %v291, %v290
    %v305 = vpack.c.b16 %v293, %v292
    %v306 = vpack.c.b16 %v295, %v294
    %v307 = vpack.c.b16 %v297, %v296
    %v308 = vpack.c.b16 %v299, %v298
    %v309 = vpack.c.b16 %v301, %v300
    %318 = vmatprep.subr.bf16.mxu0 0
    %319 = vmatpush1.bf16.msra.mxu0 %v302
    %320 = vmatprep.subr.bf16.mxu0 0
    %321 = vmatpush1.bf16.msra.mxu0 %v303
    %322 = vmatprep.subr.bf16.mxu0 0
    %323 = vmatpush1.bf16.msra.mxu0 %v304
    %324 = vmatprep.subr.bf16.mxu0 0
    %325 = vmatpush1.bf16.msra.mxu0 %v305
    %326 = vmatprep.subr.bf16.mxu0 0
    %327 = vmatpush1.bf16.msra.mxu0 %v306
    %328 = vmatprep.subr.bf16.mxu0 0
    %329 = vmatpush1.bf16.msra.mxu0 %v307
    %330 = vmatprep.subr.bf16.mxu0 0
    %331 = vmatpush1.bf16.msra.mxu0 %v308
    %332 = vmatprep.subr.bf16.mxu0 0
    %333 = vmatpush1.bf16.msra.mxu0 %v309
    %334 = vmatprep.subr.bf16.mxu0 0
    %335 = vmatpush1.bf16.msra.mxu0 0
    %336 = vmatprep.subr.bf16.mxu0 0
    %337 = vmatpush1.bf16.msra.mxu0 0
    %338 = vmatprep.subr.bf16.mxu0 0
    %339 = vmatpush1.bf16.msra.mxu0 0
    %340 = vmatprep.subr.bf16.mxu0 0
    %341 = vmatpush1.bf16.msra.mxu0 0
    %342 = vmatprep.subr.bf16.mxu0 0
    %343 = vmatpush1.bf16.msra.mxu0 0
    %344 = vmatprep.subr.bf16.mxu0 0
    %345 = vmatpush1.bf16.msra.mxu0 0
    %346 = vmatprep.subr.bf16.mxu0 0
    %347 = vmatpush1.bf16.msra.mxu0 0
    %348 = vmatprep.subr.bf16.mxu0 0
    %349 = vmatpush1.bf16.msra.mxu0 0
    %350 = vmatprep.mubr.bf16.mxu0 0
    %351 = vmatmul.mubr.bf16.gmra.mrb[0].mxu0 %v269
    %v352 = vpop.f32.mrb[0].mxu0
    %v353 = vadd.f32 0.0, %v352
    %v354 = vpop.f32.mrb[0].mxu0
    %v355 = vpop.f32.mrb[0].mxu0
    %v356 = vadd.f32 0.0, %v355
    %v357 = vpop.f32.mrb[0].mxu0
    %358 = vdwg.mxu0
    %v359 = vadd.f32 %v245, %v353
    %v360 = vadd.f32 %v248, %v356
    %v361 = vld [vmem:[%s3] sm:$0x3]
    %362 = vadd.xlane.f32.xlu0 %v359
    %v363 = vpop.xlane.xlu0 %362
    %364 = vadd.xlane.f32.xlu0 %v360
    %v365 = vpop.xlane.xlu0 %364
    %v366 = vrcp.pop 128.0
    %v367 = vmul.f32 %v363, %v366
    %v368 = vmul.f32 %v365, %v366
    %v369 = vsub.f32 %v359, %v367
    %v370 = vsub.f32 %v360, %v368
    %v371 = vmul.f32 %v369, %v369
    %v372 = vmul.f32 %v370, %v370
    %373 = vadd.xlane.f32.xlu0 %v371
    %v374 = vpop.xlane.xlu0 %373
    %375 = vadd.xlane.f32.xlu0 %v372
    %v376 = vpop.xlane.xlu0 %375
    %v377 = vmul.f32 %v374, %v366
    %v378 = vmul.f32 %v376, %v366
    %v379 = vadd.f32 %v377, 1e-05
    %v380 = vadd.f32 %v378, 1e-05
    %v381 = vrsqrt.pop %v379
    %v382 = vrsqrt.pop %v380
    %v383 = vmul.f32 %v369, %v381
    %v384 = vmul.f32 %v370, %v382
    %v385 = vlaneseq
    %v386 = vshrl.u32 %v385, 7
    %v387 = vsub.s32 0, %v386
    %v388 = vrot.slane %v361, %v387
    %v389 = vmul.f32 %v383, %v388
    %v390 = vmul.f32 %v384, %v388
    %v391 = vlaneseq
    %v392 = vshrl.u32 %v391, 7
    %v393 = vsub.s32 1, %v392
    %v394 = vrot.slane %v361, %v393
    %v395 = vadd.f32 %v389, %v394
    %v396 = vadd.f32 %v390, %v394
    %v397 = vmul.f32 %v395, %v395
    %v398 = vmul.f32 %v396, %v396
    %399 = vadd.xlane.f32.xlu0 %v397
    %v400 = vpop.xlane.xlu0 %399
    %401 = vadd.xlane.f32.xlu0 %v398
    %v402 = vpop.xlane.xlu0 %401
    %v403 = vadd.f32 %v400, 1e-12
    %v404 = vadd.f32 %v402, 1e-12
    %v405 = vrsqrt.pop %v403
    %v406 = vrsqrt.pop %v404
    %v407 = vmul.f32 %v395, %v405
    %v408 = vmul.f32 %v396, %v406
    %409 = vst [vmem:[#allocation8] sm:$0xff] %v407
    %410 = vst [vmem:[#allocation8 + $0x8] sm:$0xff] %v408
    // Predicated region
    $region30: #{tpu_custom_call.1} parent=1 // pred_check
      _
    $region31: #{tpu_custom_call.1} parent=1 // pred_check_branch
      %412 = sbr.rel (0) target = $region33
    $region32: #{tpu_custom_call.1} parent=1 // pred_region
      %s414 = ssub.s32 256, 256
      %415 = vsyncadd [#allocation4], %s414
      %s416 = sshll.u32 [#allocation8], 4
      %s417 = int_to_ptr.vmem [resolvable:$true] %s416
      %422 = dma.vmem_to_hbm [thread:$0]  %s417, 256, %s4, [#allocation4], 128, 128, 8
    $region33: #{tpu_custom_call.1} parent=1 // pred_fallthru
      _
    // Predicated region
    $region34: #{tpu_custom_call.1} parent=1 // pred_check
      _
    $region35: #{tpu_custom_call.1} parent=1 // pred_check_branch
      %424 = sbr.rel (0) target = $region37
    $region36: #{tpu_custom_call.1} parent=1 // pred_region
      %425 = dma.done [#allocation4], 256
    $region37: #{tpu_custom_call.1} parent=1 // pred_fallthru
      _
    %426 = vsyncpa [#allocation3], 1
    %427 = vsyncpa [#allocation6], 1
    %428 = vsyncpa [#allocation4], 1

</llo_original>
